<compile_context>
chip_gen: v7x
topology: tpu7x:2x2x1
jax: 0.10.0
libtpu: 0.0.40
codegen_flags: <defaults>
</compile_context>

<pallas_src>
import functools
import math

import jax
import jax.numpy as jnp
from jax.experimental import pallas as pl
from jax.experimental.pallas import tpu as pltpu

VOCAB = 10   # nn.Embedding(10, hidden_dim)
GROUP = 16   # VOCAB padded to a bf16-sublane-friendly multiple (K-dim padding)


def _round_up(x, m):
    return ((x + m - 1) // m) * m


def bond_encoder_kernel(idx_ref, hi_ref, lo_ref, out_ref, *, fold, group):
    # idx_ref : (TR, fold)               int32  -- `fold` edge ids per output row
    # hi_ref  : (fold*group, fold*H)     bf16   -- block-diag fused table, hi half
    # lo_ref  : (fold*group, fold*H)     bf16   -- block-diag fused table, lo half
    # out_ref : (TR, fold*H)             f32/bf16
    idx = idx_ref[...]                                     # (TR, fold)
    tr = idx.shape[0]
    k = hi_ref.shape[0]                                    # fold * group
    col = jax.lax.broadcasted_iota(jnp.int32, (tr, k), 1)

    # One-hot over the block-diagonal table: for group g the hot column is
    # g*group + idx[:, g].  Pure VPU compares/ors; no div/mod, no lane shuffles.
    hot = col == idx[:, 0:1]
    for g in range(1, fold):
        hot = hot | (col == idx[:, g:g + 1] + g * group)
    onehot = hot.astype(jnp.bfloat16)                      # exact 0/1 in bf16

    # Exact gather-by-matmul, bf16 operands, f32 accumulation.  hi + lo
    # reconstructs the f32 table to ~16-bit mantissa precision.
    acc = jnp.dot(onehot, hi_ref[...], preferred_element_type=jnp.float32)
    acc = acc + jnp.dot(onehot, lo_ref[...], preferred_element_type=jnp.float32)
    out_ref[...] = acc.astype(out_ref.dtype)


def bond_encoder(bond_types, emb_table, lin_weight, lin_bias, *,
                 tile_rows=2048, out_dtype=jnp.float32, trim=True):
    """Equivalent of linear(embed(bond_types)).

    bond_types: (E,) integer ids in [0, 10); returns (E, H) in out_dtype.
    tile_rows:  folded output rows per grid step (multiple of 8; sweep 2048-4096).
    trim:       if False, return the tile-padded (E_pad, H) buffer (no slice copy).
    """
    E = bond_types.shape[0]
    H = emb_table.shape[1]
    assert tile_rows % 8 == 0, "tile_rows must be a multiple of 8"

    # --- lane-dense folding: pack edges so each output row is k*128 lanes ---
    fold = 128 // math.gcd(H, 128)
    if fold > 16:
        # TODO(synk): awkward H (e.g. 100) would need a huge block-diag table;
        # fall back to unfolded (lane-sparse) stores rather than fake it.
        fold = 1

    # --- algebraic fusion + K padding + bf16 hi/lo split (wrapper glue) -----
    fused = (emb_table.astype(jnp.float32) @ lin_weight.astype(jnp.float32).T
             + lin_bias.astype(jnp.float32))                      # (VOCAB, H)
    fused_pad = jnp.zeros((GROUP, H), jnp.float32).at[:VOCAB].set(fused)
    tab = jnp.kron(jnp.eye(fold, dtype=jnp.float32), fused_pad)   # (fold*GROUP, fold*H)
    tab_hi = tab.astype(jnp.bfloat16)
    tab_lo = (tab - tab_hi.astype(jnp.float32)).astype(jnp.bfloat16)

    # --- tiling (adaptive so small inputs do not over-pad) ------------------
    rows_exact = pl.cdiv(E, fold)
    tr = min(tile_rows, _round_up(rows_exact, 8))                 # multiple of 8
    rows = _round_up(rows_exact, tr)
    e_pad = rows * fold
    grid = (rows // tr,)

    idx = jnp.zeros((e_pad,), jnp.int32).at[:E].set(bond_types.astype(jnp.int32))
    idx2d = idx.reshape(rows, fold)

    # --- explicit VMEM budget (ids block lane-pads ~32x for int32) ----------
    out_bytes = tr * fold * H * jnp.dtype(out_dtype).itemsize
    ids_bytes = tr * 128 * 4                 # each (8, fold) chunk -> (8, 128) tile
    tab_bytes = 2 * (fold * GROUP) * (fold * H) * 2
    vmem_limit = 2 * (out_bytes + ids_bytes) + 2 * tab_bytes + (4 << 20)
    vmem_limit = int(min(max(vmem_limit, 16 << 20), 48 << 20))

    out_folded = pl.pallas_call(
        functools.partial(bond_encoder_kernel, fold=fold, group=GROUP),
        out_shape=jax.ShapeDtypeStruct((rows, fold * H), out_dtype),
        grid_spec=pltpu.PrefetchScalarGridSpec(
            num_scalar_prefetch=0,
            grid=grid,
            in_specs=[
                pl.BlockSpec((tr, fold), lambda i: (i, 0)),               # ids tile
                pl.BlockSpec((fold * GROUP, fold * H), lambda i: (0, 0)),  # table hi
                pl.BlockSpec((fold * GROUP, fold * H), lambda i: (0, 0)),  # table lo
            ],
            out_specs=pl.BlockSpec((tr, fold * H), lambda i: (i, 0)),
        ),
        compiler_params=pltpu.CompilerParams(
            dimension_semantics=("parallel",),
            vmem_limit_bytes=vmem_limit),
        cost_estimate=pl.CostEstimate(
            flops=2 * 2 * rows * (fold * GROUP) * (fold * H),
            transcendentals=0,
            bytes_accessed=(rows * fold * H * jnp.dtype(out_dtype).itemsize
                            + e_pad * 4 + tab_bytes)),
    )(idx2d, tab_hi, tab_lo)

    # Row-major unfold is a free reinterpretation; only slice if we padded.
    out = out_folded.reshape(e_pad, H)
    if trim and e_pad != E:
        # NOTE: this slice is an extra E*H copy; pass trim=False and slice/fuse
        # downstream to avoid it when E is not tile-aligned.
        out = out[:E]
    return out


if __name__ == "__main__":
    hidden_dim = 32
    num_edges = 1000   # deliberately not tile-aligned -> exercises padding path

    key = jax.random.PRNGKey(0)
    k_idx, k_emb, k_w, k_b = jax.random.split(key, 4)

    # deterministic synthetic parameters (shapes from the module __init__)
    emb_table = jax.random.normal(k_emb, (VOCAB, hidden_dim), jnp.float32)
    lin_weight = jax.random.normal(k_w, (hidden_dim, hidden_dim),
                                   jnp.float32) * (1.0 / jnp.sqrt(hidden_dim))
    lin_bias = jax.random.normal(k_b, (hidden_dim,), jnp.float32) * 0.1

    # example input: bond type ids in [0, 10)
    bond_types = jax.random.randint(k_idx, (num_edges,), 0, VOCAB, dtype=jnp.int32)

    # production-default tile (adapts down to one step for this small E) ...
    out = bond_encoder(bond_types, emb_table, lin_weight, lin_bias)
    out = jax.block_until_ready(out)
    # ... and a small tile so several grid steps actually run (index_map check)
    out_multi = bond_encoder(bond_types, emb_table, lin_weight, lin_bias,
                             tile_rows=64)
    out_multi = jax.block_until_ready(out_multi)

    # pure-JAX reference for correctness check
    ref = emb_table[bond_types] @ lin_weight.T + lin_bias
    assert out.shape == (num_edges, hidden_dim)
    assert out_multi.shape == (num_edges, hidden_dim)
    # double-bf16 (hi/lo) table gives ~16-bit mantissa precision -> relaxed tol
    assert jnp.allclose(out, ref, atol=1e-4, rtol=1e-4), "mismatch vs reference"
    assert jnp.allclose(out_multi, ref, atol=1e-4, rtol=1e-4), "mismatch vs reference"

    print("KERNEL_OK")
</pallas_src>

<mosaic_0001>
module attributes {stable_mosaic.version = 11 : i64} {
  func.func @bond_encoder_kernel(%arg0: i32, %arg1: memref<256x4xi32, #tpu.memory_space<vmem>>, %arg2: memref<64x128xbf16, #tpu.memory_space<vmem>>, %arg3: memref<64x128xbf16, #tpu.memory_space<vmem>>, %arg4: memref<256x128xf32, #tpu.memory_space<vmem>>) attributes {dimension_semantics = [#tpu.dimension_semantics<parallel>], iteration_bounds = array<i64: 1>, scalar_prefetch = 0 : i64, scratch_operands = 0 : i64, tpu.core_type = #tpu.core_type<tc>, window_params = [{transform_indices = @transform_0, window_bounds = array<i64: 256, 4>}, {pipeline_mode = #tpu.pipeline_mode<synchronous>, transform_indices = @transform_1, window_bounds = array<i64: 64, 128>}, {pipeline_mode = #tpu.pipeline_mode<synchronous>, transform_indices = @transform_2, window_bounds = array<i64: 64, 128>}, {transform_indices = @transform_3, window_bounds = array<i64: 256, 128>}]} {
    %c0 = arith.constant 0 : index
    %c0_0 = arith.constant 0 : index
    %0 = vector.load %arg1[%c0, %c0_0] : memref<256x4xi32, #tpu.memory_space<vmem>>, vector<256x4xi32>
    %1 = tpu.iota {dimensions = array<i32: 1>} : vector<256x64xi32>
    %2 = vector.extract_strided_slice %0 {offsets = [0, 0], sizes = [256, 1], strides = [1, 1]} : vector<256x4xi32> to vector<256x1xi32>
    %3 = vector.broadcast %2 : vector<256x1xi32> to vector<256x64xi32>
    %4 = arith.cmpi eq, %1, %3 : vector<256x64xi32>
    %5 = vector.extract_strided_slice %0 {offsets = [0, 1], sizes = [256, 1], strides = [1, 1]} : vector<256x4xi32> to vector<256x1xi32>
    %c16_i32 = arith.constant 16 : i32
    %6 = vector.broadcast %c16_i32 : i32 to vector<256x1xi32>
    %7 = arith.addi %5, %6 : vector<256x1xi32>
    %8 = vector.broadcast %7 : vector<256x1xi32> to vector<256x64xi32>
    %9 = arith.cmpi eq, %1, %8 : vector<256x64xi32>
    %10 = arith.ori %4, %9 : vector<256x64xi1>
    %11 = vector.extract_strided_slice %0 {offsets = [0, 2], sizes = [256, 1], strides = [1, 1]} : vector<256x4xi32> to vector<256x1xi32>
    %c32_i32 = arith.constant 32 : i32
    %12 = vector.broadcast %c32_i32 : i32 to vector<256x1xi32>
    %13 = arith.addi %11, %12 : vector<256x1xi32>
    %14 = vector.broadcast %13 : vector<256x1xi32> to vector<256x64xi32>
    %15 = arith.cmpi eq, %1, %14 : vector<256x64xi32>
    %16 = arith.ori %10, %15 : vector<256x64xi1>
    %17 = vector.extract_strided_slice %0 {offsets = [0, 3], sizes = [256, 1], strides = [1, 1]} : vector<256x4xi32> to vector<256x1xi32>
    %c48_i32 = arith.constant 48 : i32
    %18 = vector.broadcast %c48_i32 : i32 to vector<256x1xi32>
    %19 = arith.addi %17, %18 : vector<256x1xi32>
    %20 = vector.broadcast %19 : vector<256x1xi32> to vector<256x64xi32>
    %21 = arith.cmpi eq, %1, %20 : vector<256x64xi32>
    %22 = arith.ori %16, %21 : vector<256x64xi1>
    %23 = arith.extui %22 : vector<256x64xi1> to vector<256x64xi32>
    %24 = arith.sitofp %23 : vector<256x64xi32> to vector<256x64xf32>
    %25 = arith.truncf %24 : vector<256x64xf32> to vector<256x64xbf16>
    %c0_1 = arith.constant 0 : index
    %c0_2 = arith.constant 0 : index
    %26 = vector.load %arg2[%c0_1, %c0_2] : memref<64x128xbf16, #tpu.memory_space<vmem>>, vector<64x128xbf16>
    %cst = arith.constant dense<0.000000e+00> : vector<256x128xf32>
    %27 = tpu.matmul %25, %26, %cst {dimension_numbers = #tpu.dot_dimension_numbers<[1], [0], [0], [1], [0, 0, 1, 1], [], []>} : vector<256x64xbf16>, vector<64x128xbf16>, vector<256x128xf32> -> vector<256x128xf32>
    %c0_3 = arith.constant 0 : index
    %c0_4 = arith.constant 0 : index
    %28 = vector.load %arg3[%c0_3, %c0_4] : memref<64x128xbf16, #tpu.memory_space<vmem>>, vector<64x128xbf16>
    %cst_5 = arith.constant dense<0.000000e+00> : vector<256x128xf32>
    %29 = tpu.matmul %25, %28, %cst_5 {dimension_numbers = #tpu.dot_dimension_numbers<[1], [0], [0], [1], [0, 0, 1, 1], [], []>} : vector<256x64xbf16>, vector<64x128xbf16>, vector<256x128xf32> -> vector<256x128xf32>
    %30 = arith.addf %27, %29 : vector<256x128xf32>
    %c0_6 = arith.constant 0 : index
    %c0_7 = arith.constant 0 : index
    %31 = vector.load %arg4[%c0_6, %c0_7] : memref<256x128xf32, #tpu.memory_space<vmem>>, vector<256x128xf32>
    tpu.vector_store %arg4[%c0_6, %c0_7], %30 {strides = array<i32>} : memref<256x128xf32, #tpu.memory_space<vmem>>, vector<256x128xf32>,
    return
  }
  func.func @transform_0(%arg0: i32) -> (i32, i32) {
    %c0_i32 = arith.constant 0 : i32
    %c0_i32_0 = arith.constant 0 : i32
    return %arg0, %c0_i32 : i32, i32
  }
  func.func @transform_1(%arg0: i32) -> (i32, i32) {
    %c0_i32 = arith.constant 0 : i32
    %c0_i32_0 = arith.constant 0 : i32
    %c0_i32_1 = arith.constant 0 : i32
    return %c0_i32, %c0_i32_0 : i32, i32
  }
  func.func @transform_2(%arg0: i32) -> (i32, i32) {
    %c0_i32 = arith.constant 0 : i32
    %c0_i32_0 = arith.constant 0 : i32
    %c0_i32_1 = arith.constant 0 : i32
    return %c0_i32, %c0_i32_0 : i32, i32
  }
  func.func @transform_3(%arg0: i32) -> (i32, i32) {
    %c0_i32 = arith.constant 0 : i32
    %c0_i32_0 = arith.constant 0 : i32
    return %arg0, %c0_i32 : i32, i32
  }
}

</mosaic_0001>

<llo_original>
// kernel: tpu_custom_call.1
$region0: #{tpu_custom_call.1}
  #allocation0 [shape = 'u32[]', space=smem, size = 0x4, offset = 0x4, fixed_abs, tag = 'smem constant byte address 0x4 - core index']
  #allocation1 [shape = 'u32[144,128]{1,0:T(1,128)}', space=vmem, size = 0x12000, scoped, tag = 'internal scratch']
  %s0 = inlined_call_operand.vmem [shape: s32[256,4], index: 0, kind: input, shape index: {}]
  %s1 = inlined_call_operand.vmem [shape: bf16[64,128], index: 1, kind: input, shape index: {}]
  %s2 = inlined_call_operand.vmem [shape: bf16[64,128], index: 2, kind: input, shape index: {}]
  %s3 = inlined_call_operand.hbm [shape: f32[256,128], index: 3, kind: output, shape index: {}]
  %s4 = sld [smem:[#allocation0]]
  $region22: #{tpu_custom_call.1} parent=0
    _
  %s6 = ssub.s32 1, %s4
  %s7 = scalar_select 0, %s6, %s4
  $region1: #{tpu_custom_call.1} parent=0
    #allocation2 [shape = 'u8[131072]{0}', space=vmem, size = 0x20000, scoped, tag = 'output window, operand 0, single buffered']
    #allocation3 [shape = 's32[1]{0}', space=sflag, size = 0x4, scoped, tag = 'scoped memory for tpu_custom_call.1']
    %8 = vsyncpa [#allocation3], 0
    // Predicated region
    $region2: #{tpu_custom_call.1} parent=1 // pred_check
      _
    $region3: #{tpu_custom_call.1} parent=1 // pred_check_branch
      %10 = sbr.rel (0) target = $region5
    $region4: #{tpu_custom_call.1} parent=1 // pred_region
      _
    $region5: #{tpu_custom_call.1} parent=1 // pred_fallthru
      _
    // Predicated region
    $region6: #{tpu_custom_call.1} parent=1 // pred_check
      _
    $region7: #{tpu_custom_call.1} parent=1 // pred_check_branch
      %12 = sbr.rel (0) target = $region9
    $region8: #{tpu_custom_call.1} parent=1 // pred_region
      _
    $region9: #{tpu_custom_call.1} parent=1 // pred_fallthru
      _
    // Predicated region
    $region10: #{tpu_custom_call.1} parent=1 // pred_check
      _
    $region11: #{tpu_custom_call.1} parent=1 // pred_check_branch
      %14 = sbr.rel (0) target = $region13
    $region12: #{tpu_custom_call.1} parent=1 // pred_region
      _
    $region13: #{tpu_custom_call.1} parent=1 // pred_fallthru
      _
    %v16 = vld [vmem:[%s0] sm:$0xff]
    %v17 = vld [vmem:[%s0 + $0x8] sm:$0xff]
    %v18 = vld [vmem:[%s0 + $0x10] sm:$0xff]
    %v19 = vld [vmem:[%s0 + $0x18] sm:$0xff]
    %v20 = vld [vmem:[%s0 + $0x20] sm:$0xff]
    %v21 = vld [vmem:[%s0 + $0x28] sm:$0xff]
    %v22 = vld [vmem:[%s0 + $0x30] sm:$0xff]
    %v23 = vld [vmem:[%s0 + $0x38] sm:$0xff]
    %v24 = vld [vmem:[%s0 + $0x40] sm:$0xff]
    %v25 = vld [vmem:[%s0 + $0x48] sm:$0xff]
    %v26 = vld [vmem:[%s0 + $0x50] sm:$0xff]
    %v27 = vld [vmem:[%s0 + $0x58] sm:$0xff]
    %v28 = vld [vmem:[%s0 + $0x60] sm:$0xff]
    %v29 = vld [vmem:[%s0 + $0x68] sm:$0xff]
    %v30 = vld [vmem:[%s0 + $0x70] sm:$0xff]
    %v31 = vld [vmem:[%s0 + $0x78] sm:$0xff]
    %v32 = vld [vmem:[%s0 + $0x80] sm:$0xff]
    %v33 = vld [vmem:[%s0 + $0x88] sm:$0xff]
    %v34 = vld [vmem:[%s0 + $0x90] sm:$0xff]
    %v35 = vld [vmem:[%s0 + $0x98] sm:$0xff]
    %v36 = vld [vmem:[%s0 + $0xa0] sm:$0xff]
    %v37 = vld [vmem:[%s0 + $0xa8] sm:$0xff]
    %v38 = vld [vmem:[%s0 + $0xb0] sm:$0xff]
    %v39 = vld [vmem:[%s0 + $0xb8] sm:$0xff]
    %v40 = vld [vmem:[%s0 + $0xc0] sm:$0xff]
    %v41 = vld [vmem:[%s0 + $0xc8] sm:$0xff]
    %v42 = vld [vmem:[%s0 + $0xd0] sm:$0xff]
    %v43 = vld [vmem:[%s0 + $0xd8] sm:$0xff]
    %v44 = vld [vmem:[%s0 + $0xe0] sm:$0xff]
    %v45 = vld [vmem:[%s0 + $0xe8] sm:$0xff]
    %v46 = vld [vmem:[%s0 + $0xf0] sm:$0xff]
    %v47 = vld [vmem:[%s0 + $0xf8] sm:$0xff]
    %v48 = vlaneseq
    %v49 = vand.u32 %v48, 127
    %50 = vset.pattern.permute.xlu0 0
    %51 = vperm.xlu0 %50, %v16
    %v52 = vpop.permute.xlu0 %51
    %53 = vset.pattern.permute.xlu0 0
    %54 = vperm.xlu0 %53, %v17
    %v55 = vpop.permute.xlu0 %54
    %56 = vset.pattern.permute.xlu0 0
    %57 = vperm.xlu0 %56, %v18
    %v58 = vpop.permute.xlu0 %57
    %59 = vset.pattern.permute.xlu0 0
    %60 = vperm.xlu0 %59, %v19
    %v61 = vpop.permute.xlu0 %60
    %62 = vset.pattern.permute.xlu0 0
    %63 = vperm.xlu0 %62, %v20
    %v64 = vpop.permute.xlu0 %63
    %65 = vset.pattern.permute.xlu0 0
    %66 = vperm.xlu0 %65, %v21
    %v67 = vpop.permute.xlu0 %66
    %68 = vset.pattern.permute.xlu0 0
    %69 = vperm.xlu0 %68, %v22
    %v70 = vpop.permute.xlu0 %69
    %71 = vset.pattern.permute.xlu0 0
    %72 = vperm.xlu0 %71, %v23
    %v73 = vpop.permute.xlu0 %72
    %74 = vset.pattern.permute.xlu0 0
    %75 = vperm.xlu0 %74, %v24
    %v76 = vpop.permute.xlu0 %75
    %77 = vset.pattern.permute.xlu0 0
    %78 = vperm.xlu0 %77, %v25
    %v79 = vpop.permute.xlu0 %78
    %80 = vset.pattern.permute.xlu0 0
    %81 = vperm.xlu0 %80, %v26
    %v82 = vpop.permute.xlu0 %81
    %83 = vset.pattern.permute.xlu0 0
    %84 = vperm.xlu0 %83, %v27
    %v85 = vpop.permute.xlu0 %84
    %86 = vset.pattern.permute.xlu0 0
    %87 = vperm.xlu0 %86, %v28
    %v88 = vpop.permute.xlu0 %87
    %89 = vset.pattern.permute.xlu0 0
    %90 = vperm.xlu0 %89, %v29
    %v91 = vpop.permute.xlu0 %90
    %92 = vset.pattern.permute.xlu0 0
    %93 = vperm.xlu0 %92, %v30
    %v94 = vpop.permute.xlu0 %93
    %95 = vset.pattern.permute.xlu0 0
    %96 = vperm.xlu0 %95, %v31
    %v97 = vpop.permute.xlu0 %96
    %98 = vset.pattern.permute.xlu0 0
    %99 = vperm.xlu0 %98, %v32
    %v100 = vpop.permute.xlu0 %99
    %101 = vset.pattern.permute.xlu0 0
    %102 = vperm.xlu0 %101, %v33
    %v103 = vpop.permute.xlu0 %102
    %104 = vset.pattern.permute.xlu0 0
    %105 = vperm.xlu0 %104, %v34
    %v106 = vpop.permute.xlu0 %105
    %107 = vset.pattern.permute.xlu0 0
    %108 = vperm.xlu0 %107, %v35
    %v109 = vpop.permute.xlu0 %108
    %110 = vset.pattern.permute.xlu0 0
    %111 = vperm.xlu0 %110, %v36
    %v112 = vpop.permute.xlu0 %111
    %113 = vset.pattern.permute.xlu0 0
    %114 = vperm.xlu0 %113, %v37
    %v115 = vpop.permute.xlu0 %114
    %116 = vset.pattern.permute.xlu0 0
    %117 = vperm.xlu0 %116, %v38
    %v118 = vpop.permute.xlu0 %117
    %119 = vset.pattern.permute.xlu0 0
    %120 = vperm.xlu0 %119, %v39
    %v121 = vpop.permute.xlu0 %120
    %122 = vset.pattern.permute.xlu0 0
    %123 = vperm.xlu0 %122, %v40
    %v124 = vpop.permute.xlu0 %123
    %125 = vset.pattern.permute.xlu0 0
    %126 = vperm.xlu0 %125, %v41
    %v127 = vpop.permute.xlu0 %126
    %128 = vset.pattern.permute.xlu0 0
    %129 = vperm.xlu0 %128, %v42
    %v130 = vpop.permute.xlu0 %129
    %131 = vset.pattern.permute.xlu0 0
    %132 = vperm.xlu0 %131, %v43
    %v133 = vpop.permute.xlu0 %132
    %134 = vset.pattern.permute.xlu0 0
    %135 = vperm.xlu0 %134, %v44
    %v136 = vpop.permute.xlu0 %135
    %137 = vset.pattern.permute.xlu0 0
    %138 = vperm.xlu0 %137, %v45
    %v139 = vpop.permute.xlu0 %138
    %140 = vset.pattern.permute.xlu0 0
    %141 = vperm.xlu0 %140, %v46
    %v142 = vpop.permute.xlu0 %141
    %143 = vset.pattern.permute.xlu0 0
    %144 = vperm.xlu0 %143, %v47
    %v145 = vpop.permute.xlu0 %144
    %vm146 = vcmp.eq.s32.totalorder %v49, %v52
    %vm147 = vcmp.eq.s32.totalorder %v49, %v55
    %vm148 = vcmp.eq.s32.totalorder %v49, %v58
    %vm149 = vcmp.eq.s32.totalorder %v49, %v61
    %vm150 = vcmp.eq.s32.totalorder %v49, %v64
    %vm151 = vcmp.eq.s32.totalorder %v49, %v67
    %vm152 = vcmp.eq.s32.totalorder %v49, %v70
    %vm153 = vcmp.eq.s32.totalorder %v49, %v73
    %vm154 = vcmp.eq.s32.totalorder %v49, %v76
    %vm155 = vcmp.eq.s32.totalorder %v49, %v79
    %vm156 = vcmp.eq.s32.totalorder %v49, %v82
    %vm157 = vcmp.eq.s32.totalorder %v49, %v85
    %vm158 = vcmp.eq.s32.totalorder %v49, %v88
    %vm159 = vcmp.eq.s32.totalorder %v49, %v91
    %vm160 = vcmp.eq.s32.totalorder %v49, %v94
    %vm161 = vcmp.eq.s32.totalorder %v49, %v97
    %vm162 = vcmp.eq.s32.totalorder %v49, %v100
    %vm163 = vcmp.eq.s32.totalorder %v49, %v103
    %vm164 = vcmp.eq.s32.totalorder %v49, %v106
    %vm165 = vcmp.eq.s32.totalorder %v49, %v109
    %vm166 = vcmp.eq.s32.totalorder %v49, %v112
    %vm167 = vcmp.eq.s32.totalorder %v49, %v115
    %vm168 = vcmp.eq.s32.totalorder %v49, %v118
    %vm169 = vcmp.eq.s32.totalorder %v49, %v121
    %vm170 = vcmp.eq.s32.totalorder %v49, %v124
    %vm171 = vcmp.eq.s32.totalorder %v49, %v127
    %vm172 = vcmp.eq.s32.totalorder %v49, %v130
    %vm173 = vcmp.eq.s32.totalorder %v49, %v133
    %vm174 = vcmp.eq.s32.totalorder %v49, %v136
    %vm175 = vcmp.eq.s32.totalorder %v49, %v139
    %vm176 = vcmp.eq.s32.totalorder %v49, %v142
    %vm177 = vcmp.eq.s32.totalorder %v49, %v145
    %v178 = vadd.s32 %v16, 16
    %v179 = vadd.s32 %v17, 16
    %v180 = vadd.s32 %v18, 16
    %v181 = vadd.s32 %v19, 16
    %v182 = vadd.s32 %v20, 16
    %v183 = vadd.s32 %v21, 16
    %v184 = vadd.s32 %v22, 16
    %v185 = vadd.s32 %v23, 16
    %v186 = vadd.s32 %v24, 16
    %v187 = vadd.s32 %v25, 16
    %v188 = vadd.s32 %v26, 16
    %v189 = vadd.s32 %v27, 16
    %v190 = vadd.s32 %v28, 16
    %v191 = vadd.s32 %v29, 16
    %v192 = vadd.s32 %v30, 16
    %v193 = vadd.s32 %v31, 16
    %v194 = vadd.s32 %v32, 16
    %v195 = vadd.s32 %v33, 16
    %v196 = vadd.s32 %v34, 16
    %v197 = vadd.s32 %v35, 16
    %v198 = vadd.s32 %v36, 16
    %v199 = vadd.s32 %v37, 16
    %v200 = vadd.s32 %v38, 16
    %v201 = vadd.s32 %v39, 16
    %v202 = vadd.s32 %v40, 16
    %v203 = vadd.s32 %v41, 16
    %v204 = vadd.s32 %v42, 16
    %v205 = vadd.s32 %v43, 16
    %v206 = vadd.s32 %v44, 16
    %v207 = vadd.s32 %v45, 16
    %v208 = vadd.s32 %v46, 16
    %v209 = vadd.s32 %v47, 16
    %210 = vset.pattern.permute.xlu0 1
    %211 = vperm.xlu0 %210, %v178
    %v212 = vpop.permute.xlu0 %211
    %213 = vset.pattern.permute.xlu0 1
    %214 = vperm.xlu0 %213, %v179
    %v215 = vpop.permute.xlu0 %214
    %216 = vset.pattern.permute.xlu0 1
    %217 = vperm.xlu0 %216, %v180
    %v218 = vpop.permute.xlu0 %217
    %219 = vset.pattern.permute.xlu0 1
    %220 = vperm.xlu0 %219, %v181
    %v221 = vpop.permute.xlu0 %220
    %222 = vset.pattern.permute.xlu0 1
    %223 = vperm.xlu0 %222, %v182
    %v224 = vpop.permute.xlu0 %223
    %225 = vset.pattern.permute.xlu0 1
    %226 = vperm.xlu0 %225, %v183
    %v227 = vpop.permute.xlu0 %226
    %228 = vset.pattern.permute.xlu0 1
    %229 = vperm.xlu0 %228, %v184
    %v230 = vpop.permute.xlu0 %229
    %231 = vset.pattern.permute.xlu0 1
    %232 = vperm.xlu0 %231, %v185
    %v233 = vpop.permute.xlu0 %232
    %234 = vset.pattern.permute.xlu0 1
    %235 = vperm.xlu0 %234, %v186
    %v236 = vpop.permute.xlu0 %235
    %237 = vset.pattern.permute.xlu0 1
    %238 = vperm.xlu0 %237, %v187
    %v239 = vpop.permute.xlu0 %238
    %240 = vset.pattern.permute.xlu0 1
    %241 = vperm.xlu0 %240, %v188
    %v242 = vpop.permute.xlu0 %241
    %243 = vset.pattern.permute.xlu0 1
    %244 = vperm.xlu0 %243, %v189
    %v245 = vpop.permute.xlu0 %244
    %246 = vset.pattern.permute.xlu0 1
    %247 = vperm.xlu0 %246, %v190
    %v248 = vpop.permute.xlu0 %247
    %249 = vset.pattern.permute.xlu0 1
    %250 = vperm.xlu0 %249, %v191
    %v251 = vpop.permute.xlu0 %250
    %252 = vset.pattern.permute.xlu0 1
    %253 = vperm.xlu0 %252, %v192
    %v254 = vpop.permute.xlu0 %253
    %255 = vset.pattern.permute.xlu0 1
    %256 = vperm.xlu0 %255, %v193
    %v257 = vpop.permute.xlu0 %256
    %258 = vset.pattern.permute.xlu0 1
    %259 = vperm.xlu0 %258, %v194
    %v260 = vpop.permute.xlu0 %259
    %261 = vset.pattern.permute.xlu0 1
    %262 = vperm.xlu0 %261, %v195
    %v263 = vpop.permute.xlu0 %262
    %264 = vset.pattern.permute.xlu0 1
    %265 = vperm.xlu0 %264, %v196
    %v266 = vpop.permute.xlu0 %265
    %267 = vset.pattern.permute.xlu0 1
    %268 = vperm.xlu0 %267, %v197
    %v269 = vpop.permute.xlu0 %268
    %270 = vset.pattern.permute.xlu0 1
    %271 = vperm.xlu0 %270, %v198
    %v272 = vpop.permute.xlu0 %271
    %273 = vset.pattern.permute.xlu0 1
    %274 = vperm.xlu0 %273, %v199
    %v275 = vpop.permute.xlu0 %274
    %276 = vset.pattern.permute.xlu0 1
    %277 = vperm.xlu0 %276, %v200
    %v278 = vpop.permute.xlu0 %277
    %279 = vset.pattern.permute.xlu0 1
    %280 = vperm.xlu0 %279, %v201
    %v281 = vpop.permute.xlu0 %280
    %282 = vset.pattern.permute.xlu0 1
    %283 = vperm.xlu0 %282, %v202
    %v284 = vpop.permute.xlu0 %283
    %285 = vset.pattern.permute.xlu0 1
    %286 = vperm.xlu0 %285, %v203
    %v287 = vpop.permute.xlu0 %286
    %288 = vset.pattern.permute.xlu0 1
    %289 = vperm.xlu0 %288, %v204
    %v290 = vpop.permute.xlu0 %289
    %291 = vset.pattern.permute.xlu0 1
    %292 = vperm.xlu0 %291, %v205
    %v293 = vpop.permute.xlu0 %292
    %294 = vset.pattern.permute.xlu0 1
    %295 = vperm.xlu0 %294, %v206
    %v296 = vpop.permute.xlu0 %295
    %297 = vset.pattern.permute.xlu0 1
    %298 = vperm.xlu0 %297, %v207
    %v299 = vpop.permute.xlu0 %298
    %300 = vset.pattern.permute.xlu0 1
    %301 = vperm.xlu0 %300, %v208
    %v302 = vpop.permute.xlu0 %301
    %303 = vset.pattern.permute.xlu0 1
    %304 = vperm.xlu0 %303, %v209
    %v305 = vpop.permute.xlu0 %304
    %vm306 = vcmp.eq.s32.totalorder %v49, %v212
    %vm307 = vcmp.eq.s32.totalorder %v49, %v215
    %vm308 = vcmp.eq.s32.totalorder %v49, %v218
    %vm309 = vcmp.eq.s32.totalorder %v49, %v221
    %vm310 = vcmp.eq.s32.totalorder %v49, %v224
    %vm311 = vcmp.eq.s32.totalorder %v49, %v227
    %vm312 = vcmp.eq.s32.totalorder %v49, %v230
    %vm313 = vcmp.eq.s32.totalorder %v49, %v233
    %vm314 = vcmp.eq.s32.totalorder %v49, %v236
    %vm315 = vcmp.eq.s32.totalorder %v49, %v239
    %vm316 = vcmp.eq.s32.totalorder %v49, %v242
    %vm317 = vcmp.eq.s32.totalorder %v49, %v245
    %vm318 = vcmp.eq.s32.totalorder %v49, %v248
    %vm319 = vcmp.eq.s32.totalorder %v49, %v251
    %vm320 = vcmp.eq.s32.totalorder %v49, %v254
    %vm321 = vcmp.eq.s32.totalorder %v49, %v257
    %vm322 = vcmp.eq.s32.totalorder %v49, %v260
    %vm323 = vcmp.eq.s32.totalorder %v49, %v263
    %vm324 = vcmp.eq.s32.totalorder %v49, %v266
    %vm325 = vcmp.eq.s32.totalorder %v49, %v269
    %vm326 = vcmp.eq.s32.totalorder %v49, %v272
    %vm327 = vcmp.eq.s32.totalorder %v49, %v275
    %vm328 = vcmp.eq.s32.totalorder %v49, %v278
    %vm329 = vcmp.eq.s32.totalorder %v49, %v281
    %vm330 = vcmp.eq.s32.totalorder %v49, %v284
    %vm331 = vcmp.eq.s32.totalorder %v49, %v287
    %vm332 = vcmp.eq.s32.totalorder %v49, %v290
    %vm333 = vcmp.eq.s32.totalorder %v49, %v293
    %vm334 = vcmp.eq.s32.totalorder %v49, %v296
    %vm335 = vcmp.eq.s32.totalorder %v49, %v299
    %vm336 = vcmp.eq.s32.totalorder %v49, %v302
    %vm337 = vcmp.eq.s32.totalorder %v49, %v305
    %vm338 = vmor %vm146, %vm306
    %vm339 = vmor %vm147, %vm307
    %vm340 = vmor %vm148, %vm308
    %vm341 = vmor %vm149, %vm309
    %vm342 = vmor %vm150, %vm310
    %vm343 = vmor %vm151, %vm311
    %vm344 = vmor %vm152, %vm312
    %vm345 = vmor %vm153, %vm313
    %vm346 = vmor %vm154, %vm314
    %vm347 = vmor %vm155, %vm315
    %vm348 = vmor %vm156, %vm316
    %vm349 = vmor %vm157, %vm317
    %vm350 = vmor %vm158, %vm318
    %vm351 = vmor %vm159, %vm319
    %vm352 = vmor %vm160, %vm320
    %vm353 = vmor %vm161, %vm321
    %vm354 = vmor %vm162, %vm322
    %vm355 = vmor %vm163, %vm323
    %vm356 = vmor %vm164, %vm324
    %vm357 = vmor %vm165, %vm325
    %vm358 = vmor %vm166, %vm326
    %vm359 = vmor %vm167, %vm327
    %vm360 = vmor %vm168, %vm328
    %vm361 = vmor %vm169, %vm329
    %vm362 = vmor %vm170, %vm330
    %vm363 = vmor %vm171, %vm331
    %vm364 = vmor %vm172, %vm332
    %vm365 = vmor %vm173, %vm333
    %vm366 = vmor %vm174, %vm334
    %vm367 = vmor %vm175, %vm335
    %vm368 = vmor %vm176, %vm336
    %vm369 = vmor %vm177, %vm337
    %v370 = vadd.s32 %v16, 32
    %v371 = vadd.s32 %v17, 32
    %v372 = vadd.s32 %v18, 32
    %v373 = vadd.s32 %v19, 32
    %v374 = vadd.s32 %v20, 32
    %v375 = vadd.s32 %v21, 32
    %v376 = vadd.s32 %v22, 32
    %v377 = vadd.s32 %v23, 32
    %v378 = vadd.s32 %v24, 32
    %v379 = vadd.s32 %v25, 32
    %v380 = vadd.s32 %v26, 32
    %v381 = vadd.s32 %v27, 32
    %v382 = vadd.s32 %v28, 32
    %v383 = vadd.s32 %v29, 32
    %v384 = vadd.s32 %v30, 32
    %v385 = vadd.s32 %v31, 32
    %v386 = vadd.s32 %v32, 32
    %v387 = vadd.s32 %v33, 32
    %v388 = vadd.s32 %v34, 32
    %v389 = vadd.s32 %v35, 32
    %v390 = vadd.s32 %v36, 32
    %v391 = vadd.s32 %v37, 32
    %v392 = vadd.s32 %v38, 32
    %v393 = vadd.s32 %v39, 32
    %v394 = vadd.s32 %v40, 32
    %v395 = vadd.s32 %v41, 32
    %v396 = vadd.s32 %v42, 32
    %v397 = vadd.s32 %v43, 32
    %v398 = vadd.s32 %v44, 32
    %v399 = vadd.s32 %v45, 32
    %v400 = vadd.s32 %v46, 32
    %v401 = vadd.s32 %v47, 32
    %402 = vset.pattern.permute.xlu0 2
    %403 = vperm.xlu0 %402, %v370
    %v404 = vpop.permute.xlu0 %403
    %405 = vset.pattern.permute.xlu0 2
    %406 = vperm.xlu0 %405, %v371
    %v407 = vpop.permute.xlu0 %406
    %408 = vset.pattern.permute.xlu0 2
    %409 = vperm.xlu0 %408, %v372
    %v410 = vpop.permute.xlu0 %409
    %411 = vset.pattern.permute.xlu0 2
    %412 = vperm.xlu0 %411, %v373
    %v413 = vpop.permute.xlu0 %412
    %414 = vset.pattern.permute.xlu0 2
    %415 = vperm.xlu0 %414, %v374
    %v416 = vpop.permute.xlu0 %415
    %417 = vset.pattern.permute.xlu0 2
    %418 = vperm.xlu0 %417, %v375
    %v419 = vpop.permute.xlu0 %418
    %420 = vset.pattern.permute.xlu0 2
    %421 = vperm.xlu0 %420, %v376
    %v422 = vpop.permute.xlu0 %421
    %423 = vset.pattern.permute.xlu0 2
    %424 = vperm.xlu0 %423, %v377
    %v425 = vpop.permute.xlu0 %424
    %426 = vset.pattern.permute.xlu0 2
    %427 = vperm.xlu0 %426, %v378
    %v428 = vpop.permute.xlu0 %427
    %429 = vset.pattern.permute.xlu0 2
    %430 = vperm.xlu0 %429, %v379
    %v431 = vpop.permute.xlu0 %430
    %432 = vset.pattern.permute.xlu0 2
    %433 = vperm.xlu0 %432, %v380
    %v434 = vpop.permute.xlu0 %433
    %435 = vset.pattern.permute.xlu0 2
    %436 = vperm.xlu0 %435, %v381
    %v437 = vpop.permute.xlu0 %436
    %438 = vset.pattern.permute.xlu0 2
    %439 = vperm.xlu0 %438, %v382
    %v440 = vpop.permute.xlu0 %439
    %441 = vset.pattern.permute.xlu0 2
    %442 = vperm.xlu0 %441, %v383
    %v443 = vpop.permute.xlu0 %442
    %444 = vset.pattern.permute.xlu0 2
    %445 = vperm.xlu0 %444, %v384
    %v446 = vpop.permute.xlu0 %445
    %447 = vset.pattern.permute.xlu0 2
    %448 = vperm.xlu0 %447, %v385
    %v449 = vpop.permute.xlu0 %448
    %450 = vset.pattern.permute.xlu0 2
    %451 = vperm.xlu0 %450, %v386
    %v452 = vpop.permute.xlu0 %451
    %453 = vset.pattern.permute.xlu0 2
    %454 = vperm.xlu0 %453, %v387
    %v455 = vpop.permute.xlu0 %454
    %456 = vset.pattern.permute.xlu0 2
    %457 = vperm.xlu0 %456, %v388
    %v458 = vpop.permute.xlu0 %457
    %459 = vset.pattern.permute.xlu0 2
    %460 = vperm.xlu0 %459, %v389
    %v461 = vpop.permute.xlu0 %460
    %462 = vset.pattern.permute.xlu0 2
    %463 = vperm.xlu0 %462, %v390
    %v464 = vpop.permute.xlu0 %463
    %465 = vset.pattern.permute.xlu0 2
    %466 = vperm.xlu0 %465, %v391
    %v467 = vpop.permute.xlu0 %466
    %468 = vset.pattern.permute.xlu0 2
    %469 = vperm.xlu0 %468, %v392
    %v470 = vpop.permute.xlu0 %469
    %471 = vset.pattern.permute.xlu0 2
    %472 = vperm.xlu0 %471, %v393
    %v473 = vpop.permute.xlu0 %472
    %474 = vset.pattern.permute.xlu0 2
    %475 = vperm.xlu0 %474, %v394
    %v476 = vpop.permute.xlu0 %475
    %477 = vset.pattern.permute.xlu0 2
    %478 = vperm.xlu0 %477, %v395
    %v479 = vpop.permute.xlu0 %478
    %480 = vset.pattern.permute.xlu0 2
    %481 = vperm.xlu0 %480, %v396
    %v482 = vpop.permute.xlu0 %481
    %483 = vset.pattern.permute.xlu0 2
    %484 = vperm.xlu0 %483, %v397
    %v485 = vpop.permute.xlu0 %484
    %486 = vset.pattern.permute.xlu0 2
    %487 = vperm.xlu0 %486, %v398
    %v488 = vpop.permute.xlu0 %487
    %489 = vset.pattern.permute.xlu0 2
    %490 = vperm.xlu0 %489, %v399
    %v491 = vpop.permute.xlu0 %490
    %492 = vset.pattern.permute.xlu0 2
    %493 = vperm.xlu0 %492, %v400
    %v494 = vpop.permute.xlu0 %493
    %495 = vset.pattern.permute.xlu0 2
    %496 = vperm.xlu0 %495, %v401
    %v497 = vpop.permute.xlu0 %496
    %vm498 = vcmp.eq.s32.totalorder %v49, %v404
    %vm499 = vcmp.eq.s32.totalorder %v49, %v407
    %vm500 = vcmp.eq.s32.totalorder %v49, %v410
    %vm501 = vcmp.eq.s32.totalorder %v49, %v413
    %vm502 = vcmp.eq.s32.totalorder %v49, %v416
    %vm503 = vcmp.eq.s32.totalorder %v49, %v419
    %vm504 = vcmp.eq.s32.totalorder %v49, %v422
    %vm505 = vcmp.eq.s32.totalorder %v49, %v425
    %vm506 = vcmp.eq.s32.totalorder %v49, %v428
    %vm507 = vcmp.eq.s32.totalorder %v49, %v431
    %vm508 = vcmp.eq.s32.totalorder %v49, %v434
    %vm509 = vcmp.eq.s32.totalorder %v49, %v437
    %vm510 = vcmp.eq.s32.totalorder %v49, %v440
    %vm511 = vcmp.eq.s32.totalorder %v49, %v443
    %vm512 = vcmp.eq.s32.totalorder %v49, %v446
    %vm513 = vcmp.eq.s32.totalorder %v49, %v449
    %vm514 = vcmp.eq.s32.totalorder %v49, %v452
    %vm515 = vcmp.eq.s32.totalorder %v49, %v455
    %vm516 = vcmp.eq.s32.totalorder %v49, %v458
    %vm517 = vcmp.eq.s32.totalorder %v49, %v461
    %vm518 = vcmp.eq.s32.totalorder %v49, %v464
    %vm519 = vcmp.eq.s32.totalorder %v49, %v467
    %vm520 = vcmp.eq.s32.totalorder %v49, %v470
    %vm521 = vcmp.eq.s32.totalorder %v49, %v473
    %vm522 = vcmp.eq.s32.totalorder %v49, %v476
    %vm523 = vcmp.eq.s32.totalorder %v49, %v479
    %vm524 = vcmp.eq.s32.totalorder %v49, %v482
    %vm525 = vcmp.eq.s32.totalorder %v49, %v485
    %vm526 = vcmp.eq.s32.totalorder %v49, %v488
    %vm527 = vcmp.eq.s32.totalorder %v49, %v491
    %vm528 = vcmp.eq.s32.totalorder %v49, %v494
    %vm529 = vcmp.eq.s32.totalorder %v49, %v497
    %vm530 = vmor %vm338, %vm498
    %vm531 = vmor %vm339, %vm499
    %vm532 = vmor %vm340, %vm500
    %vm533 = vmor %vm341, %vm501
    %vm534 = vmor %vm342, %vm502
    %vm535 = vmor %vm343, %vm503
    %vm536 = vmor %vm344, %vm504
    %vm537 = vmor %vm345, %vm505
    %vm538 = vmor %vm346, %vm506
    %vm539 = vmor %vm347, %vm507
    %vm540 = vmor %vm348, %vm508
    %vm541 = vmor %vm349, %vm509
    %vm542 = vmor %vm350, %vm510
    %vm543 = vmor %vm351, %vm511
    %vm544 = vmor %vm352, %vm512
    %vm545 = vmor %vm353, %vm513
    %vm546 = vmor %vm354, %vm514
    %vm547 = vmor %vm355, %vm515
    %vm548 = vmor %vm356, %vm516
    %vm549 = vmor %vm357, %vm517
    %vm550 = vmor %vm358, %vm518
    %vm551 = vmor %vm359, %vm519
    %vm552 = vmor %vm360, %vm520
    %vm553 = vmor %vm361, %vm521
    %vm554 = vmor %vm362, %vm522
    %vm555 = vmor %vm363, %vm523
    %vm556 = vmor %vm364, %vm524
    %vm557 = vmor %vm365, %vm525
    %vm558 = vmor %vm366, %vm526
    %vm559 = vmor %vm367, %vm527
    %vm560 = vmor %vm368, %vm528
    %vm561 = vmor %vm369, %vm529
    %v562 = vadd.s32 %v16, 48
    %v563 = vadd.s32 %v17, 48
    %v564 = vadd.s32 %v18, 48
    %v565 = vadd.s32 %v19, 48
    %v566 = vadd.s32 %v20, 48
    %v567 = vadd.s32 %v21, 48
    %v568 = vadd.s32 %v22, 48
    %v569 = vadd.s32 %v23, 48
    %v570 = vadd.s32 %v24, 48
    %v571 = vadd.s32 %v25, 48
    %v572 = vadd.s32 %v26, 48
    %v573 = vadd.s32 %v27, 48
    %v574 = vadd.s32 %v28, 48
    %v575 = vadd.s32 %v29, 48
    %v576 = vadd.s32 %v30, 48
    %v577 = vadd.s32 %v31, 48
    %v578 = vadd.s32 %v32, 48
    %v579 = vadd.s32 %v33, 48
    %v580 = vadd.s32 %v34, 48
    %v581 = vadd.s32 %v35, 48
    %v582 = vadd.s32 %v36, 48
    %v583 = vadd.s32 %v37, 48
    %v584 = vadd.s32 %v38, 48
    %v585 = vadd.s32 %v39, 48
    %v586 = vadd.s32 %v40, 48
    %v587 = vadd.s32 %v41, 48
    %v588 = vadd.s32 %v42, 48
    %v589 = vadd.s32 %v43, 48
    %v590 = vadd.s32 %v44, 48
    %v591 = vadd.s32 %v45, 48
    %v592 = vadd.s32 %v46, 48
    %v593 = vadd.s32 %v47, 48
    %594 = vset.pattern.permute.xlu0 3
    %595 = vperm.xlu0 %594, %v562
    %v596 = vpop.permute.xlu0 %595
    %597 = vset.pattern.permute.xlu0 3
    %598 = vperm.xlu0 %597, %v563
    %v599 = vpop.permute.xlu0 %598
    %600 = vset.pattern.permute.xlu0 3
    %601 = vperm.xlu0 %600, %v564
    %v602 = vpop.permute.xlu0 %601
    %603 = vset.pattern.permute.xlu0 3
    %604 = vperm.xlu0 %603, %v565
    %v605 = vpop.permute.xlu0 %604
    %606 = vset.pattern.permute.xlu0 3
    %607 = vperm.xlu0 %606, %v566
    %v608 = vpop.permute.xlu0 %607
    %609 = vset.pattern.permute.xlu0 3
    %610 = vperm.xlu0 %609, %v567
    %v611 = vpop.permute.xlu0 %610
    %612 = vset.pattern.permute.xlu0 3
    %613 = vperm.xlu0 %612, %v568
    %v614 = vpop.permute.xlu0 %613
    %615 = vset.pattern.permute.xlu0 3
    %616 = vperm.xlu0 %615, %v569
    %v617 = vpop.permute.xlu0 %616
    %618 = vset.pattern.permute.xlu0 3
    %619 = vperm.xlu0 %618, %v570
    %v620 = vpop.permute.xlu0 %619
    %621 = vset.pattern.permute.xlu0 3
    %622 = vperm.xlu0 %621, %v571
    %v623 = vpop.permute.xlu0 %622
    %624 = vset.pattern.permute.xlu0 3
    %625 = vperm.xlu0 %624, %v572
    %v626 = vpop.permute.xlu0 %625
    %627 = vset.pattern.permute.xlu0 3
    %628 = vperm.xlu0 %627, %v573
    %v629 = vpop.permute.xlu0 %628
    %630 = vset.pattern.permute.xlu0 3
    %631 = vperm.xlu0 %630, %v574
    %v632 = vpop.permute.xlu0 %631
    %633 = vset.pattern.permute.xlu0 3
    %634 = vperm.xlu0 %633, %v575
    %v635 = vpop.permute.xlu0 %634
    %636 = vset.pattern.permute.xlu0 3
    %637 = vperm.xlu0 %636, %v576
    %v638 = vpop.permute.xlu0 %637
    %639 = vset.pattern.permute.xlu0 3
    %640 = vperm.xlu0 %639, %v577
    %v641 = vpop.permute.xlu0 %640
    %642 = vset.pattern.permute.xlu0 3
    %643 = vperm.xlu0 %642, %v578
    %v644 = vpop.permute.xlu0 %643
    %645 = vset.pattern.permute.xlu0 3
    %646 = vperm.xlu0 %645, %v579
    %v647 = vpop.permute.xlu0 %646
    %648 = vset.pattern.permute.xlu0 3
    %649 = vperm.xlu0 %648, %v580
    %v650 = vpop.permute.xlu0 %649
    %651 = vset.pattern.permute.xlu0 3
    %652 = vperm.xlu0 %651, %v581
    %v653 = vpop.permute.xlu0 %652
    %654 = vset.pattern.permute.xlu0 3
    %655 = vperm.xlu0 %654, %v582
    %v656 = vpop.permute.xlu0 %655
    %657 = vset.pattern.permute.xlu0 3
    %658 = vperm.xlu0 %657, %v583
    %v659 = vpop.permute.xlu0 %658
    %660 = vset.pattern.permute.xlu0 3
    %661 = vperm.xlu0 %660, %v584
    %v662 = vpop.permute.xlu0 %661
    %663 = vset.pattern.permute.xlu0 3
    %664 = vperm.xlu0 %663, %v585
    %v665 = vpop.permute.xlu0 %664
    %666 = vset.pattern.permute.xlu0 3
    %667 = vperm.xlu0 %666, %v586
    %v668 = vpop.permute.xlu0 %667
    %669 = vset.pattern.permute.xlu0 3
    %670 = vperm.xlu0 %669, %v587
    %v671 = vpop.permute.xlu0 %670
    %672 = vset.pattern.permute.xlu0 3
    %673 = vperm.xlu0 %672, %v588
    %v674 = vpop.permute.xlu0 %673
    %675 = vset.pattern.permute.xlu0 3
    %676 = vperm.xlu0 %675, %v589
    %v677 = vpop.permute.xlu0 %676
    %678 = vset.pattern.permute.xlu0 3
    %679 = vperm.xlu0 %678, %v590
    %v680 = vpop.permute.xlu0 %679
    %681 = vset.pattern.permute.xlu0 3
    %682 = vperm.xlu0 %681, %v591
    %v683 = vpop.permute.xlu0 %682
    %684 = vset.pattern.permute.xlu0 3
    %685 = vperm.xlu0 %684, %v592
    %v686 = vpop.permute.xlu0 %685
    %687 = vset.pattern.permute.xlu0 3
    %688 = vperm.xlu0 %687, %v593
    %v689 = vpop.permute.xlu0 %688
    %vm690 = vcmp.eq.s32.totalorder %v49, %v596
    %vm691 = vcmp.eq.s32.totalorder %v49, %v599
    %vm692 = vcmp.eq.s32.totalorder %v49, %v602
    %vm693 = vcmp.eq.s32.totalorder %v49, %v605
    %vm694 = vcmp.eq.s32.totalorder %v49, %v608
    %vm695 = vcmp.eq.s32.totalorder %v49, %v611
    %vm696 = vcmp.eq.s32.totalorder %v49, %v614
    %vm697 = vcmp.eq.s32.totalorder %v49, %v617
    %vm698 = vcmp.eq.s32.totalorder %v49, %v620
    %vm699 = vcmp.eq.s32.totalorder %v49, %v623
    %vm700 = vcmp.eq.s32.totalorder %v49, %v626
    %vm701 = vcmp.eq.s32.totalorder %v49, %v629
    %vm702 = vcmp.eq.s32.totalorder %v49, %v632
    %vm703 = vcmp.eq.s32.totalorder %v49, %v635
    %vm704 = vcmp.eq.s32.totalorder %v49, %v638
    %vm705 = vcmp.eq.s32.totalorder %v49, %v641
    %vm706 = vcmp.eq.s32.totalorder %v49, %v644
    %vm707 = vcmp.eq.s32.totalorder %v49, %v647
    %vm708 = vcmp.eq.s32.totalorder %v49, %v650
    %vm709 = vcmp.eq.s32.totalorder %v49, %v653
    %vm710 = vcmp.eq.s32.totalorder %v49, %v656
    %vm711 = vcmp.eq.s32.totalorder %v49, %v659
    %vm712 = vcmp.eq.s32.totalorder %v49, %v662
    %vm713 = vcmp.eq.s32.totalorder %v49, %v665
    %vm714 = vcmp.eq.s32.totalorder %v49, %v668
    %vm715 = vcmp.eq.s32.totalorder %v49, %v671
    %vm716 = vcmp.eq.s32.totalorder %v49, %v674
    %vm717 = vcmp.eq.s32.totalorder %v49, %v677
    %vm718 = vcmp.eq.s32.totalorder %v49, %v680
    %vm719 = vcmp.eq.s32.totalorder %v49, %v683
    %vm720 = vcmp.eq.s32.totalorder %v49, %v686
    %vm721 = vcmp.eq.s32.totalorder %v49, %v689
    %vm722 = vmor %vm530, %vm690
    %vm723 = vmor %vm531, %vm691
    %vm724 = vmor %vm532, %vm692
    %vm725 = vmor %vm533, %vm693
    %vm726 = vmor %vm534, %vm694
    %vm727 = vmor %vm535, %vm695
    %vm728 = vmor %vm536, %vm696
    %vm729 = vmor %vm537, %vm697
    %vm730 = vmor %vm538, %vm698
    %vm731 = vmor %vm539, %vm699
    %vm732 = vmor %vm540, %vm700
    %vm733 = vmor %vm541, %vm701
    %vm734 = vmor %vm542, %vm702
    %vm735 = vmor %vm543, %vm703
    %vm736 = vmor %vm544, %vm704
    %vm737 = vmor %vm545, %vm705
    %vm738 = vmor %vm546, %vm706
    %vm739 = vmor %vm547, %vm707
    %vm740 = vmor %vm548, %vm708
    %vm741 = vmor %vm549, %vm709
    %vm742 = vmor %vm550, %vm710
    %vm743 = vmor %vm551, %vm711
    %vm744 = vmor %vm552, %vm712
    %vm745 = vmor %vm553, %vm713
    %vm746 = vmor %vm554, %vm714
    %vm747 = vmor %vm555, %vm715
    %vm748 = vmor %vm556, %vm716
    %vm749 = vmor %vm557, %vm717
    %vm750 = vmor %vm558, %vm718
    %vm751 = vmor %vm559, %vm719
    %vm752 = vmor %vm560, %vm720
    %vm753 = vmor %vm561, %vm721
    %v754 = vsel %vm722, 1, 0
    %v755 = vsel %vm723, 1, 0
    %v756 = vsel %vm724, 1, 0
    %v757 = vsel %vm725, 1, 0
    %v758 = vsel %vm726, 1, 0
    %v759 = vsel %vm727, 1, 0
    %v760 = vsel %vm728, 1, 0
    %v761 = vsel %vm729, 1, 0
    %v762 = vsel %vm730, 1, 0
    %v763 = vsel %vm731, 1, 0
    %v764 = vsel %vm732, 1, 0
    %v765 = vsel %vm733, 1, 0
    %v766 = vsel %vm734, 1, 0
    %v767 = vsel %vm735, 1, 0
    %v768 = vsel %vm736, 1, 0
    %v769 = vsel %vm737, 1, 0
    %v770 = vsel %vm738, 1, 0
    %v771 = vsel %vm739, 1, 0
    %v772 = vsel %vm740, 1, 0
    %v773 = vsel %vm741, 1, 0
    %v774 = vsel %vm742, 1, 0
    %v775 = vsel %vm743, 1, 0
    %v776 = vsel %vm744, 1, 0
    %v777 = vsel %vm745, 1, 0
    %v778 = vsel %vm746, 1, 0
    %v779 = vsel %vm747, 1, 0
    %v780 = vsel %vm748, 1, 0
    %v781 = vsel %vm749, 1, 0
    %v782 = vsel %vm750, 1, 0
    %v783 = vsel %vm751, 1, 0
    %v784 = vsel %vm752, 1, 0
    %v785 = vsel %vm753, 1, 0
    %v786 = vcvt.s32.f32 %v754
    %v787 = vcvt.s32.f32 %v755
    %v788 = vcvt.s32.f32 %v756
    %v789 = vcvt.s32.f32 %v757
    %v790 = vcvt.s32.f32 %v758
    %v791 = vcvt.s32.f32 %v759
    %v792 = vcvt.s32.f32 %v760
    %v793 = vcvt.s32.f32 %v761
    %v794 = vcvt.s32.f32 %v762
    %v795 = vcvt.s32.f32 %v763
    %v796 = vcvt.s32.f32 %v764
    %v797 = vcvt.s32.f32 %v765
    %v798 = vcvt.s32.f32 %v766
    %v799 = vcvt.s32.f32 %v767
    %v800 = vcvt.s32.f32 %v768
    %v801 = vcvt.s32.f32 %v769
    %v802 = vcvt.s32.f32 %v770
    %v803 = vcvt.s32.f32 %v771
    %v804 = vcvt.s32.f32 %v772
    %v805 = vcvt.s32.f32 %v773
    %v806 = vcvt.s32.f32 %v774
    %v807 = vcvt.s32.f32 %v775
    %v808 = vcvt.s32.f32 %v776
    %v809 = vcvt.s32.f32 %v777
    %v810 = vcvt.s32.f32 %v778
    %v811 = vcvt.s32.f32 %v779
    %v812 = vcvt.s32.f32 %v780
    %v813 = vcvt.s32.f32 %v781
    %v814 = vcvt.s32.f32 %v782
    %v815 = vcvt.s32.f32 %v783
    %v816 = vcvt.s32.f32 %v784
    %v817 = vcvt.s32.f32 %v785
    %v818 = vpack.c.bf16 %v787, %v786
    %v819 = vpack.c.bf16 %v789, %v788
    %v820 = vpack.c.bf16 %v791, %v790
    %v821 = vpack.c.bf16 %v793, %v792
    %v822 = vpack.c.bf16 %v795, %v794
    %v823 = vpack.c.bf16 %v797, %v796
    %v824 = vpack.c.bf16 %v799, %v798
    %v825 = vpack.c.bf16 %v801, %v800
    %v826 = vpack.c.bf16 %v803, %v802
    %v827 = vpack.c.bf16 %v805, %v804
    %v828 = vpack.c.bf16 %v807, %v806
    %v829 = vpack.c.bf16 %v809, %v808
    %v830 = vpack.c.bf16 %v811, %v810
    %v831 = vpack.c.bf16 %v813, %v812
    %v832 = vpack.c.bf16 %v815, %v814
    %v833 = vpack.c.bf16 %v817, %v816
    %v834 = vld [vmem:[%s1] sm:$0xf]
    %v835 = vld [vmem:[%s1 + $0x4] sm:$0xf]
    %v836 = vld [vmem:[%s1 + $0x8] sm:$0xf]
    %v837 = vld [vmem:[%s1 + $0xc] sm:$0xf]
    %v838 = vld [vmem:[%s1 + $0x10] sm:$0xf]
    %v839 = vld [vmem:[%s1 + $0x14] sm:$0xf]
    %v840 = vld [vmem:[%s1 + $0x18] sm:$0xf]
    %v841 = vld [vmem:[%s1 + $0x1c] sm:$0xf]
    %v842 = vld [vmem:[%s2] sm:$0xf]
    %v843 = vld [vmem:[%s2 + $0x4] sm:$0xf]
    %v844 = vld [vmem:[%s2 + $0x8] sm:$0xf]
    %v845 = vld [vmem:[%s2 + $0xc] sm:$0xf]
    %v846 = vld [vmem:[%s2 + $0x10] sm:$0xf]
    %v847 = vld [vmem:[%s2 + $0x14] sm:$0xf]
    %v848 = vld [vmem:[%s2 + $0x18] sm:$0xf]
    %v849 = vld [vmem:[%s2 + $0x1c] sm:$0xf]
    %v858 = vunpack.c.l.b16 %v842
    %v859 = vunpack.c.l.b16 %v843
    %v860 = vunpack.c.l.b16 %v844
    %v861 = vunpack.c.l.b16 %v845
    %v862 = vunpack.c.l.b16 %v846
    %v863 = vunpack.c.l.b16 %v847
    %v864 = vunpack.c.l.b16 %v848
    %v865 = vunpack.c.l.b16 %v849
    %v866 = vpack.c.b16 %v859, %v858
    %v867 = vpack.c.b16 %v861, %v860
    %v868 = vpack.c.b16 %v863, %v862
    %v869 = vpack.c.b16 %v865, %v864
    %vm874 = vcmask 523264
    %v876 = vsel %vm874, %v818, 0
    %v879 = vsel %vm874, %v819, 0
    %v882 = vsel %vm874, %v820, 0
    %v885 = vsel %vm874, %v821, 0
    %v888 = vsel %vm874, %v822, 0
    %v891 = vsel %vm874, %v823, 0
    %v894 = vsel %vm874, %v824, 0
    %v897 = vsel %vm874, %v825, 0
    %v900 = vsel %vm874, %v826, 0
    %v903 = vsel %vm874, %v827, 0
    %v906 = vsel %vm874, %v828, 0
    %v909 = vsel %vm874, %v829, 0
    %v912 = vsel %vm874, %v830, 0
    %v915 = vsel %vm874, %v831, 0
    %v918 = vsel %vm874, %v832, 0
    %v921 = vsel %vm874, %v833, 0
    %923 = vmatprep.subr.bf16.mxu0 0
    %924 = vmatpush1.bf16.msra.mxu0 %v866
    %925 = vmatprep.subr.bf16.mxu0 0
    %926 = vmatpush1.bf16.msra.mxu0 %v867
    %927 = vmatprep.subr.bf16.mxu0 0
    %928 = vmatpush1.bf16.msra.mxu0 %v868
    %929 = vmatprep.subr.bf16.mxu0 0
    %930 = vmatpush1.bf16.msra.mxu0 %v869
    %931 = vmatprep.subr.bf16.mxu0 0
    %932 = vmatpush1.bf16.msra.mxu0 0
    %933 = vmatprep.subr.bf16.mxu0 0
    %934 = vmatpush1.bf16.msra.mxu0 0
    %935 = vmatprep.subr.bf16.mxu0 0
    %936 = vmatpush1.bf16.msra.mxu0 0
    %937 = vmatprep.subr.bf16.mxu0 0
    %938 = vmatpush1.bf16.msra.mxu0 0
    %939 = vmatprep.subr.bf16.mxu0 0
    %940 = vmatpush1.bf16.msra.mxu0 0
    %941 = vmatprep.subr.bf16.mxu0 0
    %942 = vmatpush1.bf16.msra.mxu0 0
    %943 = vmatprep.subr.bf16.mxu0 0
    %944 = vmatpush1.bf16.msra.mxu0 0
    %945 = vmatprep.subr.bf16.mxu0 0
    %946 = vmatpush1.bf16.msra.mxu0 0
    %947 = vmatprep.subr.bf16.mxu0 0
    %948 = vmatpush1.bf16.msra.mxu0 0
    %949 = vmatprep.subr.bf16.mxu0 0
    %950 = vmatpush1.bf16.msra.mxu0 0
    %951 = vmatprep.subr.bf16.mxu0 0
    %952 = vmatpush1.bf16.msra.mxu0 0
    %953 = vmatprep.subr.bf16.mxu0 0
    %954 = vmatpush1.bf16.msra.mxu0 0
    %955 = vmatprep.mubr.bf16.mxu0 0
    %956 = vmatmul.mubr.bf16.gmra.mrb[0].mxu0 %v876
    %v957 = vpop.f32.mrb[0].mxu0
    %v958 = vadd.f32 0.0, %v957
    %v959 = vpop.f32.mrb[0].mxu0
    %v960 = vpop.f32.mrb[0].mxu0
    %v961 = vadd.f32 0.0, %v960
    %v962 = vpop.f32.mrb[0].mxu0
    %963 = vmatprep.mubr.bf16.mxu0 0
    %964 = vmatmul.mubr.bf16.gmra.mrb[0].mxu0 %v879
    %v965 = vpop.f32.mrb[0].mxu0
    %v966 = vadd.f32 0.0, %v965
    %v967 = vpop.f32.mrb[0].mxu0
    %v968 = vpop.f32.mrb[0].mxu0
    %v969 = vadd.f32 0.0, %v968
    %v970 = vpop.f32.mrb[0].mxu0
    %971 = vmatprep.mubr.bf16.mxu0 0
    %972 = vmatmul.mubr.bf16.gmra.mrb[0].mxu0 %v882
    %v973 = vpop.f32.mrb[0].mxu0
    %v974 = vadd.f32 0.0, %v973
    %v975 = vpop.f32.mrb[0].mxu0
    %v976 = vpop.f32.mrb[0].mxu0
    %v977 = vadd.f32 0.0, %v976
    %v978 = vpop.f32.mrb[0].mxu0
    %979 = vmatprep.mubr.bf16.mxu0 0
    %980 = vmatmul.mubr.bf16.gmra.mrb[0].mxu0 %v885
    %v981 = vpop.f32.mrb[0].mxu0
    %v982 = vadd.f32 0.0, %v981
    %v983 = vpop.f32.mrb[0].mxu0
    %v984 = vpop.f32.mrb[0].mxu0
    %v985 = vadd.f32 0.0, %v984
    %v986 = vpop.f32.mrb[0].mxu0
    %987 = vmatprep.mubr.bf16.mxu0 0
    %988 = vmatmul.mubr.bf16.gmra.mrb[0].mxu0 %v888
    %v989 = vpop.f32.mrb[0].mxu0
    %v990 = vadd.f32 0.0, %v989
    %v991 = vpop.f32.mrb[0].mxu0
    %v992 = vpop.f32.mrb[0].mxu0
    %v993 = vadd.f32 0.0, %v992
    %v994 = vpop.f32.mrb[0].mxu0
    %995 = vmatprep.mubr.bf16.mxu0 0
    %996 = vmatmul.mubr.bf16.gmra.mrb[0].mxu0 %v891
    %v997 = vpop.f32.mrb[0].mxu0
    %v998 = vadd.f32 0.0, %v997
    %v999 = vpop.f32.mrb[0].mxu0
    %v1000 = vpop.f32.mrb[0].mxu0
    %v1001 = vadd.f32 0.0, %v1000
    %v1002 = vpop.f32.mrb[0].mxu0
    %1003 = vmatprep.mubr.bf16.mxu0 0
    %1004 = vmatmul.mubr.bf16.gmra.mrb[0].mxu0 %v894
    %v1005 = vpop.f32.mrb[0].mxu0
    %v1006 = vadd.f32 0.0, %v1005
    %v1007 = vpop.f32.mrb[0].mxu0
    %v1008 = vpop.f32.mrb[0].mxu0
    %v1009 = vadd.f32 0.0, %v1008
    %v1010 = vpop.f32.mrb[0].mxu0
    %1011 = vmatprep.mubr.bf16.mxu0 0
    %1012 = vmatmul.mubr.bf16.gmra.mrb[0].mxu0 %v897
    %v1013 = vpop.f32.mrb[0].mxu0
    %v1014 = vadd.f32 0.0, %v1013
    %v1015 = vpop.f32.mrb[0].mxu0
    %v1016 = vpop.f32.mrb[0].mxu0
    %v1017 = vadd.f32 0.0, %v1016
    %v1018 = vpop.f32.mrb[0].mxu0
    %1019 = vmatprep.mubr.bf16.mxu0 0
    %1020 = vmatmul.mubr.bf16.gmra.mrb[0].mxu0 %v900
    %v1021 = vpop.f32.mrb[0].mxu0
    %v1022 = vadd.f32 0.0, %v1021
    %v1023 = vpop.f32.mrb[0].mxu0
    %v1024 = vpop.f32.mrb[0].mxu0
    %v1025 = vadd.f32 0.0, %v1024
    %v1026 = vpop.f32.mrb[0].mxu0
    %1027 = vmatprep.mubr.bf16.mxu0 0
    %1028 = vmatmul.mubr.bf16.gmra.mrb[0].mxu0 %v903
    %v1029 = vpop.f32.mrb[0].mxu0
    %v1030 = vadd.f32 0.0, %v1029
    %v1031 = vpop.f32.mrb[0].mxu0
    %v1032 = vpop.f32.mrb[0].mxu0
    %v1033 = vadd.f32 0.0, %v1032
    %v1034 = vpop.f32.mrb[0].mxu0
    %1035 = vmatprep.mubr.bf16.mxu0 0
    %1036 = vmatmul.mubr.bf16.gmra.mrb[0].mxu0 %v906
    %v1037 = vpop.f32.mrb[0].mxu0
    %v1038 = vadd.f32 0.0, %v1037
    %v1039 = vpop.f32.mrb[0].mxu0
    %v1040 = vpop.f32.mrb[0].mxu0
    %v1041 = vadd.f32 0.0, %v1040
    %v1042 = vpop.f32.mrb[0].mxu0
    %1043 = vmatprep.mubr.bf16.mxu0 0
    %1044 = vmatmul.mubr.bf16.gmra.mrb[0].mxu0 %v909
    %v1045 = vpop.f32.mrb[0].mxu0
    %v1046 = vadd.f32 0.0, %v1045
    %v1047 = vpop.f32.mrb[0].mxu0
    %v1048 = vpop.f32.mrb[0].mxu0
    %v1049 = vadd.f32 0.0, %v1048
    %v1050 = vpop.f32.mrb[0].mxu0
    %1051 = vmatprep.mubr.bf16.mxu0 0
    %1052 = vmatmul.mubr.bf16.gmra.mrb[0].mxu0 %v912
    %v1053 = vpop.f32.mrb[0].mxu0
    %v1054 = vadd.f32 0.0, %v1053
    %v1055 = vpop.f32.mrb[0].mxu0
    %v1056 = vpop.f32.mrb[0].mxu0
    %v1057 = vadd.f32 0.0, %v1056
    %v1058 = vpop.f32.mrb[0].mxu0
    %1059 = vmatprep.mubr.bf16.mxu0 0
    %1060 = vmatmul.mubr.bf16.gmra.mrb[0].mxu0 %v915
    %v1061 = vpop.f32.mrb[0].mxu0
    %v1062 = vadd.f32 0.0, %v1061
    %v1063 = vpop.f32.mrb[0].mxu0
    %v1064 = vpop.f32.mrb[0].mxu0
    %v1065 = vadd.f32 0.0, %v1064
    %v1066 = vpop.f32.mrb[0].mxu0
    %1067 = vmatprep.mubr.bf16.mxu0 0
    %1068 = vmatmul.mubr.bf16.gmra.mrb[0].mxu0 %v918
    %v1069 = vpop.f32.mrb[0].mxu0
    %v1070 = vadd.f32 0.0, %v1069
    %v1071 = vpop.f32.mrb[0].mxu0
    %v1072 = vpop.f32.mrb[0].mxu0
    %v1073 = vadd.f32 0.0, %v1072
    %v1074 = vpop.f32.mrb[0].mxu0
    %1075 = vmatprep.mubr.bf16.mxu0 0
    %1076 = vmatmul.mubr.bf16.gmra.mrb[0].mxu0 %v921
    %v1077 = vpop.f32.mrb[0].mxu0
    %v1078 = vadd.f32 0.0, %v1077
    %v1079 = vpop.f32.mrb[0].mxu0
    %v1080 = vpop.f32.mrb[0].mxu0
    %v1081 = vadd.f32 0.0, %v1080
    %v1082 = vpop.f32.mrb[0].mxu0
    %1083 = vdwg.mxu0
    %v1092 = vunpack.c.l.b16 %v834
    %v1093 = vunpack.c.l.b16 %v835
    %v1094 = vunpack.c.l.b16 %v836
    %v1095 = vunpack.c.l.b16 %v837
    %v1096 = vunpack.c.l.b16 %v838
    %v1097 = vunpack.c.l.b16 %v839
    %v1098 = vunpack.c.l.b16 %v840
    %v1099 = vunpack.c.l.b16 %v841
    %v1100 = vpack.c.b16 %v1093, %v1092
    %v1101 = vpack.c.b16 %v1095, %v1094
    %v1102 = vpack.c.b16 %v1097, %v1096
    %v1103 = vpack.c.b16 %v1099, %v1098
    %1108 = vmatprep.subr.bf16.mxu0 0
    %1109 = vmatpush1.bf16.msra.mxu0 %v1100
    %1110 = vmatprep.subr.bf16.mxu0 0
    %1111 = vmatpush1.bf16.msra.mxu0 %v1101
    %1112 = vmatprep.subr.bf16.mxu0 0
    %1113 = vmatpush1.bf16.msra.mxu0 %v1102
    %1114 = vmatprep.subr.bf16.mxu0 0
    %1115 = vmatpush1.bf16.msra.mxu0 %v1103
    %1116 = vmatprep.subr.bf16.mxu0 0
    %1117 = vmatpush1.bf16.msra.mxu0 0
    %1118 = vmatprep.subr.bf16.mxu0 0
    %1119 = vmatpush1.bf16.msra.mxu0 0
    %1120 = vmatprep.subr.bf16.mxu0 0
    %1121 = vmatpush1.bf16.msra.mxu0 0
    %1122 = vmatprep.subr.bf16.mxu0 0
    %1123 = vmatpush1.bf16.msra.mxu0 0
    %1124 = vmatprep.subr.bf16.mxu0 0
    %1125 = vmatpush1.bf16.msra.mxu0 0
    %1126 = vmatprep.subr.bf16.mxu0 0
    %1127 = vmatpush1.bf16.msra.mxu0 0
    %1128 = vmatprep.subr.bf16.mxu0 0
    %1129 = vmatpush1.bf16.msra.mxu0 0
    %1130 = vmatprep.subr.bf16.mxu0 0
    %1131 = vmatpush1.bf16.msra.mxu0 0
    %1132 = vmatprep.subr.bf16.mxu0 0
    %1133 = vmatpush1.bf16.msra.mxu0 0
    %1134 = vmatprep.subr.bf16.mxu0 0
    %1135 = vmatpush1.bf16.msra.mxu0 0
    %1136 = vmatprep.subr.bf16.mxu0 0
    %1137 = vmatpush1.bf16.msra.mxu0 0
    %1138 = vmatprep.subr.bf16.mxu0 0
    %1139 = vmatpush1.bf16.msra.mxu0 0
    %1140 = vmatprep.mubr.bf16.mxu0 0
    %1141 = vmatmul.mubr.bf16.gmra.mrb[0].mxu0 %v876
    %v1142 = vpop.f32.mrb[0].mxu0
    %v1143 = vadd.f32 %v958, %v1142
    %v1144 = vpop.f32.mrb[0].mxu0
    %v1145 = vpop.f32.mrb[0].mxu0
    %v1146 = vadd.f32 %v961, %v1145
    %v1147 = vpop.f32.mrb[0].mxu0
    %1148 = vmatprep.mubr.bf16.mxu0 0
    %1149 = vmatmul.mubr.bf16.gmra.mrb[0].mxu0 %v879
    %v1150 = vpop.f32.mrb[0].mxu0
    %v1151 = vadd.f32 %v966, %v1150
    %v1152 = vpop.f32.mrb[0].mxu0
    %v1153 = vpop.f32.mrb[0].mxu0
    %v1154 = vadd.f32 %v969, %v1153
    %v1155 = vpop.f32.mrb[0].mxu0
    %1156 = vmatprep.mubr.bf16.mxu0 0
    %1157 = vmatmul.mubr.bf16.gmra.mrb[0].mxu0 %v882
    %v1158 = vpop.f32.mrb[0].mxu0
    %v1159 = vadd.f32 %v974, %v1158
    %v1160 = vpop.f32.mrb[0].mxu0
    %v1161 = vpop.f32.mrb[0].mxu0
    %v1162 = vadd.f32 %v977, %v1161
    %v1163 = vpop.f32.mrb[0].mxu0
    %1164 = vmatprep.mubr.bf16.mxu0 0
    %1165 = vmatmul.mubr.bf16.gmra.mrb[0].mxu0 %v885
    %v1166 = vpop.f32.mrb[0].mxu0
    %v1167 = vadd.f32 %v982, %v1166
    %v1168 = vpop.f32.mrb[0].mxu0
    %v1169 = vpop.f32.mrb[0].mxu0
    %v1170 = vadd.f32 %v985, %v1169
    %v1171 = vpop.f32.mrb[0].mxu0
    %1172 = vmatprep.mubr.bf16.mxu0 0
    %1173 = vmatmul.mubr.bf16.gmra.mrb[0].mxu0 %v888
    %v1174 = vpop.f32.mrb[0].mxu0
    %v1175 = vadd.f32 %v990, %v1174
    %v1176 = vpop.f32.mrb[0].mxu0
    %v1177 = vpop.f32.mrb[0].mxu0
    %v1178 = vadd.f32 %v993, %v1177
    %v1179 = vpop.f32.mrb[0].mxu0
    %1180 = vmatprep.mubr.bf16.mxu0 0
    %1181 = vmatmul.mubr.bf16.gmra.mrb[0].mxu0 %v891
    %v1182 = vpop.f32.mrb[0].mxu0
    %v1183 = vadd.f32 %v998, %v1182
    %v1184 = vpop.f32.mrb[0].mxu0
    %v1185 = vpop.f32.mrb[0].mxu0
    %v1186 = vadd.f32 %v1001, %v1185
    %v1187 = vpop.f32.mrb[0].mxu0
    %1188 = vmatprep.mubr.bf16.mxu0 0
    %1189 = vmatmul.mubr.bf16.gmra.mrb[0].mxu0 %v894
    %v1190 = vpop.f32.mrb[0].mxu0
    %v1191 = vadd.f32 %v1006, %v1190
    %v1192 = vpop.f32.mrb[0].mxu0
    %v1193 = vpop.f32.mrb[0].mxu0
    %v1194 = vadd.f32 %v1009, %v1193
    %v1195 = vpop.f32.mrb[0].mxu0
    %1196 = vmatprep.mubr.bf16.mxu0 0
    %1197 = vmatmul.mubr.bf16.gmra.mrb[0].mxu0 %v897
    %v1198 = vpop.f32.mrb[0].mxu0
    %v1199 = vadd.f32 %v1014, %v1198
    %v1200 = vpop.f32.mrb[0].mxu0
    %v1201 = vpop.f32.mrb[0].mxu0
    %v1202 = vadd.f32 %v1017, %v1201
    %v1203 = vpop.f32.mrb[0].mxu0
    %1204 = vmatprep.mubr.bf16.mxu0 0
    %1205 = vmatmul.mubr.bf16.gmra.mrb[0].mxu0 %v900
    %v1206 = vpop.f32.mrb[0].mxu0
    %v1207 = vadd.f32 %v1022, %v1206
    %v1208 = vpop.f32.mrb[0].mxu0
    %v1209 = vpop.f32.mrb[0].mxu0
    %v1210 = vadd.f32 %v1025, %v1209
    %v1211 = vpop.f32.mrb[0].mxu0
    %1212 = vmatprep.mubr.bf16.mxu0 0
    %1213 = vmatmul.mubr.bf16.gmra.mrb[0].mxu0 %v903
    %v1214 = vpop.f32.mrb[0].mxu0
    %v1215 = vadd.f32 %v1030, %v1214
    %v1216 = vpop.f32.mrb[0].mxu0
    %v1217 = vpop.f32.mrb[0].mxu0
    %v1218 = vadd.f32 %v1033, %v1217
    %v1219 = vpop.f32.mrb[0].mxu0
    %1220 = vmatprep.mubr.bf16.mxu0 0
    %1221 = vmatmul.mubr.bf16.gmra.mrb[0].mxu0 %v906
    %v1222 = vpop.f32.mrb[0].mxu0
    %v1223 = vadd.f32 %v1038, %v1222
    %v1224 = vpop.f32.mrb[0].mxu0
    %v1225 = vpop.f32.mrb[0].mxu0
    %v1226 = vadd.f32 %v1041, %v1225
    %v1227 = vpop.f32.mrb[0].mxu0
    %1228 = vmatprep.mubr.bf16.mxu0 0
    %1229 = vmatmul.mubr.bf16.gmra.mrb[0].mxu0 %v909
    %v1230 = vpop.f32.mrb[0].mxu0
    %v1231 = vadd.f32 %v1046, %v1230
    %v1232 = vpop.f32.mrb[0].mxu0
    %v1233 = vpop.f32.mrb[0].mxu0
    %v1234 = vadd.f32 %v1049, %v1233
    %v1235 = vpop.f32.mrb[0].mxu0
    %1236 = vmatprep.mubr.bf16.mxu0 0
    %1237 = vmatmul.mubr.bf16.gmra.mrb[0].mxu0 %v912
    %v1238 = vpop.f32.mrb[0].mxu0
    %v1239 = vadd.f32 %v1054, %v1238
    %v1240 = vpop.f32.mrb[0].mxu0
    %v1241 = vpop.f32.mrb[0].mxu0
    %v1242 = vadd.f32 %v1057, %v1241
    %v1243 = vpop.f32.mrb[0].mxu0
    %1244 = vmatprep.mubr.bf16.mxu0 0
    %1245 = vmatmul.mubr.bf16.gmra.mrb[0].mxu0 %v915
    %v1246 = vpop.f32.mrb[0].mxu0
    %v1247 = vadd.f32 %v1062, %v1246
    %v1248 = vpop.f32.mrb[0].mxu0
    %v1249 = vpop.f32.mrb[0].mxu0
    %v1250 = vadd.f32 %v1065, %v1249
    %v1251 = vpop.f32.mrb[0].mxu0
    %1252 = vmatprep.mubr.bf16.mxu0 0
    %1253 = vmatmul.mubr.bf16.gmra.mrb[0].mxu0 %v918
    %v1254 = vpop.f32.mrb[0].mxu0
    %v1255 = vadd.f32 %v1070, %v1254
    %v1256 = vpop.f32.mrb[0].mxu0
    %v1257 = vpop.f32.mrb[0].mxu0
    %v1258 = vadd.f32 %v1073, %v1257
    %v1259 = vpop.f32.mrb[0].mxu0
    %1260 = vmatprep.mubr.bf16.mxu0 0
    %1261 = vmatmul.mubr.bf16.gmra.mrb[0].mxu0 %v921
    %v1262 = vpop.f32.mrb[0].mxu0
    %v1263 = vadd.f32 %v1078, %v1262
    %v1264 = vpop.f32.mrb[0].mxu0
    %v1265 = vpop.f32.mrb[0].mxu0
    %v1266 = vadd.f32 %v1081, %v1265
    %v1267 = vpop.f32.mrb[0].mxu0
    %1268 = vdwg.mxu0
    %1269 = vst [vmem:[#allocation2] sm:$0xff] %v1143
    %1270 = vst [vmem:[#allocation2 + $0x8] sm:$0xff] %v1146
    %1271 = vst [vmem:[#allocation2 + $0x10] sm:$0xff] %v1151
    %1272 = vst [vmem:[#allocation2 + $0x18] sm:$0xff] %v1154
    %1273 = vst [vmem:[#allocation2 + $0x20] sm:$0xff] %v1159
    %1274 = vst [vmem:[#allocation2 + $0x28] sm:$0xff] %v1162
    %1275 = vst [vmem:[#allocation2 + $0x30] sm:$0xff] %v1167
    %1276 = vst [vmem:[#allocation2 + $0x38] sm:$0xff] %v1170
    %1277 = vst [vmem:[#allocation2 + $0x40] sm:$0xff] %v1175
    %1278 = vst [vmem:[#allocation2 + $0x48] sm:$0xff] %v1178
    %1279 = vst [vmem:[#allocation2 + $0x50] sm:$0xff] %v1183
    %1280 = vst [vmem:[#allocation2 + $0x58] sm:$0xff] %v1186
    %1281 = vst [vmem:[#allocation2 + $0x60] sm:$0xff] %v1191
    %1282 = vst [vmem:[#allocation2 + $0x68] sm:$0xff] %v1194
    %1283 = vst [vmem:[#allocation2 + $0x70] sm:$0xff] %v1199
    %1284 = vst [vmem:[#allocation2 + $0x78] sm:$0xff] %v1202
    %1285 = vst [vmem:[#allocation2 + $0x80] sm:$0xff] %v1207
    %1286 = vst [vmem:[#allocation2 + $0x88] sm:$0xff] %v1210
    %1287 = vst [vmem:[#allocation2 + $0x90] sm:$0xff] %v1215
    %1288 = vst [vmem:[#allocation2 + $0x98] sm:$0xff] %v1218
    %1289 = vst [vmem:[#allocation2 + $0xa0] sm:$0xff] %v1223
    %1290 = vst [vmem:[#allocation2 + $0xa8] sm:$0xff] %v1226
    %1291 = vst [vmem:[#allocation2 + $0xb0] sm:$0xff] %v1231
    %1292 = vst [vmem:[#allocation2 + $0xb8] sm:$0xff] %v1234
    %1293 = vst [vmem:[#allocation2 + $0xc0] sm:$0xff] %v1239
    %1294 = vst [vmem:[#allocation2 + $0xc8] sm:$0xff] %v1242
    %1295 = vst [vmem:[#allocation2 + $0xd0] sm:$0xff] %v1247
    %1296 = vst [vmem:[#allocation2 + $0xd8] sm:$0xff] %v1250
    %1297 = vst [vmem:[#allocation2 + $0xe0] sm:$0xff] %v1255
    %1298 = vst [vmem:[#allocation2 + $0xe8] sm:$0xff] %v1258
    %1299 = vst [vmem:[#allocation2 + $0xf0] sm:$0xff] %v1263
    %1300 = vst [vmem:[#allocation2 + $0xf8] sm:$0xff] %v1266
    // Predicated region
    $region14: #{tpu_custom_call.1} parent=1 // pred_check
      _
    $region15: #{tpu_custom_call.1} parent=1 // pred_check_branch
      %1302 = sbr.rel (0) target = $region17
    $region16: #{tpu_custom_call.1} parent=1 // pred_region
      %s1304 = ssub.s32 4096, 4096
      %1305 = vsyncadd [#allocation3], %s1304
      %s1306 = sshll.u32 [#allocation2], 4
      %s1307 = int_to_ptr.vmem [resolvable:$true] %s1306
      %1312 = dma.vmem_to_hbm [thread:$0]  %s1307, 4096, %s3, [#allocation3], 128, 128, 8
    $region17: #{tpu_custom_call.1} parent=1 // pred_fallthru
      _
    // Predicated region
    $region18: #{tpu_custom_call.1} parent=1 // pred_check
      _
    $region19: #{tpu_custom_call.1} parent=1 // pred_check_branch
      %1314 = sbr.rel (0) target = $region21
    $region20: #{tpu_custom_call.1} parent=1 // pred_region
      %1315 = dma.done [#allocation3], 4096
    $region21: #{tpu_custom_call.1} parent=1 // pred_fallthru
      _
    %1316 = vsyncpa [#allocation3], 1

</llo_original>
